<compile_context>
chip_gen: v5e
topology: v5e:2x2
jax: 0.10.0
libtpu: 0.0.40
codegen_flags: <defaults>
</compile_context>

<pallas_src>
import functools

import jax
import jax.numpy as jnp
from jax.experimental import pallas as pl
from jax.experimental.pallas import tpu as pltpu

LANE = 128          # vreg lane width
BATCH_ALIGN = 16    # bf16 sublane packing (16, 128) -> batch-tile granularity
MIN_SPLIT = 128     # only force >=2 batch tiles (v7x 2-TC) once tiles are this big


def _round_up(n, m):
    return (n + m - 1) // m * m


def _cdiv(a, b):
    return -(-a // b)


def a3c_kernel(x_ref, w1_ref, b1_ref, w2_ref, b2_ref, wh_ref, bh_ref,
               out_ref, *, out_size):
    """Fused forward pass for one (tb, in_features) bf16 batch tile."""
    mxu_dtype = w1_ref.dtype            # bf16 operands -> MXU, f32 accumulate
    x = x_ref[...]                      # already bf16; no in-kernel cast

    # fc1 + relu  (bias add / relu in f32 — v5e VPU has no bf16)
    h1 = jnp.dot(x, w1_ref[...], preferred_element_type=jnp.float32) + b1_ref[...]
    h1 = jnp.maximum(h1, 0.0)

    # fc2 + relu
    h2 = jnp.dot(h1.astype(mxu_dtype), w2_ref[...],
                 preferred_element_type=jnp.float32) + b2_ref[...]
    h2 = jnp.maximum(h2, 0.0)

    # Fused actor+critic head: lanes [0, out_size) = actor logits,
    # lane out_size = critic value, remaining lanes = zero padding.
    head = jnp.dot(h2.astype(mxu_dtype), wh_ref[...],
                   preferred_element_type=jnp.float32) + bh_ref[...]

    # (1, head_pad) lane mask; the jnp.where's broadcast it (keeps VALU light).
    lane = jax.lax.broadcasted_iota(jnp.int32, (1, head.shape[-1]), 1)
    is_logit = lane < out_size

    # Numerically stable softmax restricted to the actor lanes.
    # Exact normalization (plain divide) so probs sum to 1 to f32 precision.
    logits = jnp.where(is_logit, head, jnp.float32(-1e30))
    m = jnp.max(logits, axis=-1, keepdims=True)
    e = jnp.exp(logits - m)
    denom = jnp.sum(e, axis=-1, keepdims=True)
    probs = e / denom

    # Single lane-dense output slab: probs where is_logit, raw head (value /
    # zero padding) elsewhere.  One unmasked vst + one writeback DMA.
    out_ref[...] = jnp.where(is_logit, probs, head).astype(out_ref.dtype)


def init_params(key, input_size, hidden_size, output_size,
                mxu_dtype=jnp.bfloat16):
    """nn.Linear-style U(-1/sqrt(fan_in)) init, stored transposed (in, out).

    Hidden / head dims are zero-padded to lane-dense multiples of 128 at init
    time; the input-feature (K) dim is left un-padded (cheap K=16 MXU passes,
    the kernel is memory-bound).  Actor and critic heads are fused into one
    (hidden, out+1)-padded weight/bias pair."""
    ks = jax.random.split(key, 8)

    def linear(kw, kb, fan_in, fan_out):
        bound = 1.0 / float(fan_in) ** 0.5
        w = jax.random.uniform(kw, (fan_in, fan_out), jnp.float32, -bound, bound)
        b = jax.random.uniform(kb, (fan_out,), jnp.float32, -bound, bound)
        return w, b

    w1, b1 = linear(ks[0], ks[1], input_size, hidden_size)
    w2, b2 = linear(ks[2], ks[3], hidden_size, hidden_size)
    wa, ba = linear(ks[4], ks[5], hidden_size, output_size)   # actor
    wc, bc = linear(ks[6], ks[7], hidden_size, 1)             # critic

    h_pad = _round_up(hidden_size, LANE)
    head_pad = _round_up(output_size + 1, LANE)

    def pad2(w, rows, cols):
        return jnp.zeros((rows, cols), jnp.float32).at[:w.shape[0], :w.shape[1]].set(w)

    def pad_bias(b, cols):
        return jnp.zeros((1, cols), jnp.float32).at[0, :b.shape[0]].set(b)

    # Fused head: columns [0, out) actor, column out critic, rest zero.
    wh = jnp.concatenate([wa, wc], axis=1)
    bh = jnp.concatenate([ba, bc], axis=0)

    w1p = pad2(w1, input_size, h_pad).astype(mxu_dtype)   # K dim un-padded
    w2p = pad2(w2, h_pad, h_pad).astype(mxu_dtype)
    whp = pad2(wh, h_pad, head_pad).astype(mxu_dtype)
    b1p = pad_bias(b1, h_pad)                             # biases stay f32
    b2p = pad_bias(b2, h_pad)
    bhp = pad_bias(bh, head_pad)
    return (w1p, b1p, w2p, b2p, whp, bhp)


def a3c_forward(x, params, output_size, *, block_b=2048):
    """Run the fused A3C forward.  Returns (action_probs, state_value)."""
    w1, b1, w2, b2, wh, bh = params
    B, in_features = x.shape
    assert w1.shape[0] == in_features
    h_pad = w1.shape[1]
    head_pad = wh.shape[1]

    # Batch tiling:
    #  - tiles <= block_b (per-step VMEM at 2048 rows is ~10-12 MiB, well
    #    under even v7x's 64 MiB),
    #  - padding waste bounded to < one 16-row group per tile,
    #  - force >= 2 tiles once the batch is big enough so the "parallel" grid
    #    axis can feed both of v7x's TensorCores.
    B_eff = max(B, BATCH_ALIGN)
    n_tiles = _cdiv(B_eff, block_b)
    if B_eff >= 2 * MIN_SPLIT:
        n_tiles = max(n_tiles, 2)
    tb = _round_up(_cdiv(B_eff, n_tiles), BATCH_ALIGN)
    b_pad = n_tiles * tb
    grid = (n_tiles,)

    # Ship x as bf16, un-padded along K: halves (vs f32) and un-inflates
    # (vs K=128 padding) the dominant per-tile input DMA.
    x_p = (jnp.zeros((b_pad, in_features), jnp.bfloat16)
           .at[:B, :].set(x.astype(jnp.bfloat16)))

    def const_spec(arr):
        return pl.BlockSpec(arr.shape, lambda i: (0, 0))

    in_specs = [
        pl.BlockSpec((tb, in_features), lambda i: (i, 0)),   # x tile
        const_spec(w1), const_spec(b1),
        const_spec(w2), const_spec(b2),
        const_spec(wh), const_spec(bh),
    ]
    out_specs = pl.BlockSpec((tb, head_pad), lambda i: (i, 0))
    out_shape = jax.ShapeDtypeStruct((b_pad, head_pad), jnp.float32)

    weight_bytes = sum(int(a.size) * a.dtype.itemsize
                       for a in (w1, b1, w2, b2, wh, bh))
    cost = pl.CostEstimate(
        flops=2 * b_pad * (in_features * h_pad + h_pad * h_pad + h_pad * head_pad),
        transcendentals=b_pad * head_pad,          # exp
        bytes_accessed=int(b_pad * in_features * 2   # bf16 x
                           + weight_bytes
                           + b_pad * head_pad * 4),  # f32 output slab
    )

    out_slab = pl.pallas_call(
        functools.partial(a3c_kernel, out_size=output_size),
        out_shape=out_shape,
        grid=grid,
        in_specs=in_specs,
        out_specs=out_specs,
        compiler_params=pltpu.CompilerParams(
            dimension_semantics=("parallel",),      # shard batch tiles on v7x TCs
            vmem_limit_bytes=48 * 1024 * 1024,      # headroom under v7x 64 MiB
        ),
        cost_estimate=cost,
    )(x_p, w1, b1, w2, b2, wh, bh)

    probs = out_slab[:B, :output_size]
    value = out_slab[:B, output_size:output_size + 1]
    return probs, value


def reference_forward(x, params, output_size):
    """Plain-JAX reference mirroring the kernel's math (bf16 MXU operands,
    f32 accumulation/elementwise) for correctness checking."""
    w1, b1, w2, b2, wh, bh = params
    mxu_dtype = w1.dtype

    h1 = jnp.maximum(
        jnp.dot(x.astype(mxu_dtype), w1, preferred_element_type=jnp.float32) + b1, 0.0)
    h2 = jnp.maximum(
        jnp.dot(h1.astype(mxu_dtype), w2, preferred_element_type=jnp.float32) + b2, 0.0)
    head = jnp.dot(h2.astype(mxu_dtype), wh,
                   preferred_element_type=jnp.float32) + bh
    probs = jax.nn.softmax(head[:, :output_size], axis=-1)
    value = head[:, output_size:output_size + 1]
    return probs, value


if __name__ == "__main__":
    key = jax.random.PRNGKey(0)
    k_x, k_p = jax.random.split(key)

    batch = 8
    input_size = 16
    hidden_size = 32
    output_size = 8

    x = jax.random.normal(k_x, (batch, input_size), jnp.float32)
    params = init_params(k_p, input_size, hidden_size, output_size)

    probs, value = a3c_forward(x, params, output_size)
    jax.block_until_ready((probs, value))

    ref_probs, ref_value = reference_forward(x, params, output_size)
    assert probs.shape == (batch, output_size)
    assert value.shape == (batch, 1)
    assert jnp.allclose(probs, ref_probs, atol=1e-3, rtol=1e-3)
    assert jnp.allclose(value, ref_value, atol=1e-3, rtol=1e-3)
    # Exact softmax normalization in-kernel -> sums to 1 to f32 precision.
    assert jnp.allclose(jnp.sum(probs, axis=-1), 1.0, atol=1e-3)

    print("KERNEL_OK")
</pallas_src>

<mosaic_0001>
module attributes {stable_mosaic.version = 11 : i64} {
  func.func @a3c_kernel(%arg0: i32, %arg1: memref<16x16xbf16, #tpu.memory_space<vmem>>, %arg2: memref<16x128xbf16, #tpu.memory_space<vmem>>, %arg3: memref<1x128xf32, #tpu.memory_space<vmem>>, %arg4: memref<128x128xbf16, #tpu.memory_space<vmem>>, %arg5: memref<1x128xf32, #tpu.memory_space<vmem>>, %arg6: memref<128x128xbf16, #tpu.memory_space<vmem>>, %arg7: memref<1x128xf32, #tpu.memory_space<vmem>>, %arg8: memref<16x128xf32, #tpu.memory_space<vmem>>) attributes {dimension_semantics = [#tpu.dimension_semantics<parallel>], iteration_bounds = array<i64: 1>, scalar_prefetch = 0 : i64, scratch_operands = 0 : i64, tpu.core_type = #tpu.core_type<tc>, window_params = [{transform_indices = @transform_0, window_bounds = array<i64: 16, 16>}, {pipeline_mode = #tpu.pipeline_mode<synchronous>, transform_indices = @transform_1, window_bounds = array<i64: 16, 128>}, {pipeline_mode = #tpu.pipeline_mode<synchronous>, transform_indices = @transform_2, window_bounds = array<i64: 1, 128>}, {pipeline_mode = #tpu.pipeline_mode<synchronous>, transform_indices = @transform_3, window_bounds = array<i64: 128, 128>}, {pipeline_mode = #tpu.pipeline_mode<synchronous>, transform_indices = @transform_4, window_bounds = array<i64: 1, 128>}, {pipeline_mode = #tpu.pipeline_mode<synchronous>, transform_indices = @transform_5, window_bounds = array<i64: 128, 128>}, {pipeline_mode = #tpu.pipeline_mode<synchronous>, transform_indices = @transform_6, window_bounds = array<i64: 1, 128>}, {transform_indices = @transform_7, window_bounds = array<i64: 16, 128>}]} {
    %c0 = arith.constant 0 : index
    %c0_0 = arith.constant 0 : index
    %0 = vector.load %arg1[%c0, %c0_0] : memref<16x16xbf16, #tpu.memory_space<vmem>>, vector<16x16xbf16>
    %c0_1 = arith.constant 0 : index
    %c0_2 = arith.constant 0 : index
    %1 = vector.load %arg2[%c0_1, %c0_2] : memref<16x128xbf16, #tpu.memory_space<vmem>>, vector<16x128xbf16>
    %cst = arith.constant dense<0.000000e+00> : vector<16x128xf32>
    %2 = tpu.matmul %0, %1, %cst {dimension_numbers = #tpu.dot_dimension_numbers<[1], [0], [0], [1], [0, 0, 1, 1], [], []>} : vector<16x16xbf16>, vector<16x128xbf16>, vector<16x128xf32> -> vector<16x128xf32>
    %c0_3 = arith.constant 0 : index
    %c0_4 = arith.constant 0 : index
    %3 = vector.load %arg3[%c0_3, %c0_4] : memref<1x128xf32, #tpu.memory_space<vmem>>, vector<1x128xf32>
    %4 = vector.broadcast %3 : vector<1x128xf32> to vector<16x128xf32>
    %5 = arith.addf %2, %4 : vector<16x128xf32>
    %cst_5 = arith.constant 0.000000e+00 : f32
    %6 = vector.broadcast %cst_5 : f32 to vector<16x128xf32>
    %7 = arith.maximumf %5, %6 : vector<16x128xf32>
    %8 = arith.truncf %7 : vector<16x128xf32> to vector<16x128xbf16>
    %c0_6 = arith.constant 0 : index
    %c0_7 = arith.constant 0 : index
    %9 = vector.load %arg4[%c0_6, %c0_7] : memref<128x128xbf16, #tpu.memory_space<vmem>>, vector<128x128xbf16>
    %cst_8 = arith.constant dense<0.000000e+00> : vector<16x128xf32>
    %10 = tpu.matmul %8, %9, %cst_8 {dimension_numbers = #tpu.dot_dimension_numbers<[1], [0], [0], [1], [0, 0, 1, 1], [], []>} : vector<16x128xbf16>, vector<128x128xbf16>, vector<16x128xf32> -> vector<16x128xf32>
    %c0_9 = arith.constant 0 : index
    %c0_10 = arith.constant 0 : index
    %11 = vector.load %arg5[%c0_9, %c0_10] : memref<1x128xf32, #tpu.memory_space<vmem>>, vector<1x128xf32>
    %12 = vector.broadcast %11 : vector<1x128xf32> to vector<16x128xf32>
    %13 = arith.addf %10, %12 : vector<16x128xf32>
    %cst_11 = arith.constant 0.000000e+00 : f32
    %14 = vector.broadcast %cst_11 : f32 to vector<16x128xf32>
    %15 = arith.maximumf %13, %14 : vector<16x128xf32>
    %16 = arith.truncf %15 : vector<16x128xf32> to vector<16x128xbf16>
    %c0_12 = arith.constant 0 : index
    %c0_13 = arith.constant 0 : index
    %17 = vector.load %arg6[%c0_12, %c0_13] : memref<128x128xbf16, #tpu.memory_space<vmem>>, vector<128x128xbf16>
    %cst_14 = arith.constant dense<0.000000e+00> : vector<16x128xf32>
    %18 = tpu.matmul %16, %17, %cst_14 {dimension_numbers = #tpu.dot_dimension_numbers<[1], [0], [0], [1], [0, 0, 1, 1], [], []>} : vector<16x128xbf16>, vector<128x128xbf16>, vector<16x128xf32> -> vector<16x128xf32>
    %c0_15 = arith.constant 0 : index
    %c0_16 = arith.constant 0 : index
    %19 = vector.load %arg7[%c0_15, %c0_16] : memref<1x128xf32, #tpu.memory_space<vmem>>, vector<1x128xf32>
    %20 = vector.broadcast %19 : vector<1x128xf32> to vector<16x128xf32>
    %21 = arith.addf %18, %20 : vector<16x128xf32>
    %22 = tpu.iota {dimensions = array<i32: 1>} : vector<1x128xi32>
    %c8_i32 = arith.constant 8 : i32
    %23 = vector.broadcast %c8_i32 : i32 to vector<1x128xi32>
    %24 = arith.cmpi slt, %22, %23 : vector<1x128xi32>
    %cst_17 = arith.constant -1.000000e+30 : f32
    %25 = vector.shape_cast %24 : vector<1x128xi1> to vector<1x128xi1>
    %26 = vector.broadcast %25 : vector<1x128xi1> to vector<16x128xi1>
    %27 = vector.broadcast %cst_17 : f32 to vector<16x128xf32>
    %28 = arith.select %26, %21, %27 : vector<16x128xi1>, vector<16x128xf32>
    %cst_18 = arith.constant dense<0xFF800000> : vector<16xf32>
    %29 = vector.multi_reduction <maximumf>, %28, %cst_18 [1] : vector<16x128xf32> to vector<16xf32>
    %30 = vector.shape_cast %29 : vector<16xf32> to vector<16x1xf32>
    %31 = vector.broadcast %30 : vector<16x1xf32> to vector<16x128xf32>
    %32 = arith.subf %28, %31 : vector<16x128xf32>
    %33 = math.exp %32 : vector<16x128xf32>
    %cst_19 = arith.constant dense<0.000000e+00> : vector<16xf32>
    %34 = vector.multi_reduction <add>, %33, %cst_19 [1] : vector<16x128xf32> to vector<16xf32>
    %35 = vector.shape_cast %34 : vector<16xf32> to vector<16x1xf32>
    %36 = vector.broadcast %35 : vector<16x1xf32> to vector<16x128xf32>
    %37 = arith.divf %33, %36 : vector<16x128xf32>
    %38 = vector.shape_cast %24 : vector<1x128xi1> to vector<1x128xi1>
    %39 = vector.broadcast %38 : vector<1x128xi1> to vector<16x128xi1>
    %40 = arith.select %39, %37, %21 : vector<16x128xi1>, vector<16x128xf32>
    %c0_20 = arith.constant 0 : index
    %c0_21 = arith.constant 0 : index
    %41 = vector.load %arg8[%c0_20, %c0_21] : memref<16x128xf32, #tpu.memory_space<vmem>>, vector<16x128xf32>
    tpu.vector_store %arg8[%c0_20, %c0_21], %40 {strides = array<i32>} : memref<16x128xf32, #tpu.memory_space<vmem>>, vector<16x128xf32>,
    return
  }
  func.func @transform_0(%arg0: i32) -> (i32, i32) {
    %c0_i32 = arith.constant 0 : i32
    %c0_i32_0 = arith.constant 0 : i32
    return %arg0, %c0_i32 : i32, i32
  }
  func.func @transform_1(%arg0: i32) -> (i32, i32) {
    %c0_i32 = arith.constant 0 : i32
    %c0_i32_0 = arith.constant 0 : i32
    %c0_i32_1 = arith.constant 0 : i32
    return %c0_i32, %c0_i32_0 : i32, i32
  }
  func.func @transform_2(%arg0: i32) -> (i32, i32) {
    %c0_i32 = arith.constant 0 : i32
    %c0_i32_0 = arith.constant 0 : i32
    %c0_i32_1 = arith.constant 0 : i32
    return %c0_i32, %c0_i32_0 : i32, i32
  }
  func.func @transform_3(%arg0: i32) -> (i32, i32) {
    %c0_i32 = arith.constant 0 : i32
    %c0_i32_0 = arith.constant 0 : i32
    %c0_i32_1 = arith.constant 0 : i32
    return %c0_i32, %c0_i32_0 : i32, i32
  }
  func.func @transform_4(%arg0: i32) -> (i32, i32) {
    %c0_i32 = arith.constant 0 : i32
    %c0_i32_0 = arith.constant 0 : i32
    %c0_i32_1 = arith.constant 0 : i32
    return %c0_i32, %c0_i32_0 : i32, i32
  }
  func.func @transform_5(%arg0: i32) -> (i32, i32) {
    %c0_i32 = arith.constant 0 : i32
    %c0_i32_0 = arith.constant 0 : i32
    %c0_i32_1 = arith.constant 0 : i32
    return %c0_i32, %c0_i32_0 : i32, i32
  }
  func.func @transform_6(%arg0: i32) -> (i32, i32) {
    %c0_i32 = arith.constant 0 : i32
    %c0_i32_0 = arith.constant 0 : i32
    %c0_i32_1 = arith.constant 0 : i32
    return %c0_i32, %c0_i32_0 : i32, i32
  }
  func.func @transform_7(%arg0: i32) -> (i32, i32) {
    %c0_i32 = arith.constant 0 : i32
    %c0_i32_0 = arith.constant 0 : i32
    return %arg0, %c0_i32 : i32, i32
  }
}

</mosaic_0001>

<llo_original>
// kernel: tpu_custom_call.1
$region0: #{tpu_custom_call.1}
  #allocation0 [shape = 'u32[]', space=smem, size = 0x4, offset = 0x4, fixed_abs, tag = 'smem constant byte address 0x4 - core index']
  #allocation1 [shape = 'u32[72,128]{1,0:T(1,128)}', space=vmem, size = 0x9000, scoped, tag = 'internal scratch']
  %s0 = inlined_call_operand.hbm [shape: bf16[16,16], index: 0, kind: input, shape index: {}]
  %s1 = inlined_call_operand.hbm [shape: bf16[16,128], index: 1, kind: input, shape index: {}]
  %s2 = inlined_call_operand.vmem [shape: f32[1,128], index: 2, kind: input, shape index: {}]
  %s3 = inlined_call_operand.hbm [shape: bf16[128,128], index: 3, kind: input, shape index: {}]
  %s4 = inlined_call_operand.vmem [shape: f32[1,128], index: 4, kind: input, shape index: {}]
  %s5 = inlined_call_operand.hbm [shape: bf16[128,128], index: 5, kind: input, shape index: {}]
  %s6 = inlined_call_operand.vmem [shape: f32[1,128], index: 6, kind: input, shape index: {}]
  %s7 = inlined_call_operand.hbm [shape: f32[16,128], index: 7, kind: output, shape index: {}]
  %s8 = sld [smem:[#allocation0]]
  $region54: #{tpu_custom_call.1} parent=0
    _
  %s10 = ssub.s32 1, %s8
  %s11 = scalar_select 0, %s10, %s8
  $region1: #{tpu_custom_call.1} parent=0
    #allocation2 [shape = 'u8[4096]{0}', space=vmem, size = 0x1000, scoped, tag = 'input window, operand 0, single buffered']
    #allocation3 [shape = 's32[1]{0}', space=sflag, size = 0x4, scoped, tag = 'scoped memory for tpu_custom_call.1']
    #allocation4 [shape = 's32[1]{0}', space=sflag, size = 0x4, scoped, tag = 'scoped memory for tpu_custom_call.1']
    #allocation5 [shape = 'u8[4096]{0}', space=vmem, size = 0x1000, scoped, tag = 'input window, operand 1, single buffered']
    #allocation6 [shape = 's32[1]{0}', space=sflag, size = 0x4, scoped, tag = 'scoped memory for tpu_custom_call.1']
    #allocation7 [shape = 'u8[32768]{0}', space=vmem, size = 0x8000, scoped, tag = 'input window, operand 3, single buffered']
    #allocation8 [shape = 'u8[32768]{0}', space=vmem, size = 0x8000, scoped, tag = 'input window, operand 5, single buffered']
    #allocation9 [shape = 's32[1]{0}', space=sflag, size = 0x4, scoped, tag = 'scoped memory for tpu_custom_call.1']
    #allocation10 [shape = 'u8[8192]{0}', space=vmem, size = 0x2000, scoped, tag = 'output window, operand 0, single buffered']
    %12 = vsyncpa [#allocation3], 0
    %13 = vsyncpa [#allocation6], 0
    %14 = vsyncpa [#allocation9], 0
    %15 = vsyncpa [#allocation4], 0
    // Predicated region
    $region2: #{tpu_custom_call.1} parent=1 // pred_check
      _
    $region3: #{tpu_custom_call.1} parent=1 // pred_check_branch
      %17 = sbr.rel (0) target = $region5
    $region4: #{tpu_custom_call.1} parent=1 // pred_region
      %19 = vsyncadd [#allocation3], 0
      %s20 = sshll.u32 %s0, 4
      %s21 = int_to_ptr.hbm [resolvable:$true] %s20
      %s22 = sshll.u32 [#allocation2], 4
      %s23 = int_to_ptr.vmem [resolvable:$true] %s22
      %28 = dma.hbm_to_vmem [thread:$0]  %s21, 128, %s23, [#allocation3], 64, 64, 4
    $region5: #{tpu_custom_call.1} parent=1 // pred_fallthru
      _
    // Predicated region
    $region6: #{tpu_custom_call.1} parent=1 // pred_check
      _
    $region7: #{tpu_custom_call.1} parent=1 // pred_check_branch
      %30 = sbr.rel (0) target = $region9
    $region8: #{tpu_custom_call.1} parent=1 // pred_region
      %32 = vsyncadd [#allocation6], 0
      %s33 = sshll.u32 %s1, 4
      %s34 = int_to_ptr.hbm [resolvable:$true] %s33
      %s35 = sshll.u32 [#allocation5], 4
      %s36 = int_to_ptr.vmem [resolvable:$true] %s35
      %41 = dma.hbm_to_vmem [thread:$0]  %s34, 128, %s36, [#allocation6], 64, 64, 4
    $region9: #{tpu_custom_call.1} parent=1 // pred_fallthru
      _
    // Predicated region
    $region10: #{tpu_custom_call.1} parent=1 // pred_check
      _
    $region11: #{tpu_custom_call.1} parent=1 // pred_check_branch
      %43 = sbr.rel (0) target = $region13
    $region12: #{tpu_custom_call.1} parent=1 // pred_region
      _
    $region13: #{tpu_custom_call.1} parent=1 // pred_fallthru
      _
    // Predicated region
    $region14: #{tpu_custom_call.1} parent=1 // pred_check
      _
    $region15: #{tpu_custom_call.1} parent=1 // pred_check_branch
      %45 = sbr.rel (0) target = $region17
    $region16: #{tpu_custom_call.1} parent=1 // pred_region
      %47 = vsyncadd [#allocation6], 0
      %s48 = sshll.u32 %s3, 4
      %s49 = int_to_ptr.hbm [resolvable:$true] %s48
      %s50 = sshll.u32 [#allocation7], 4
      %s51 = int_to_ptr.vmem [resolvable:$true] %s50
      %56 = dma.hbm_to_vmem [thread:$0]  %s49, 1024, %s51, [#allocation6], 64, 64, 4
    $region17: #{tpu_custom_call.1} parent=1 // pred_fallthru
      _
    // Predicated region
    $region18: #{tpu_custom_call.1} parent=1 // pred_check
      _
    $region19: #{tpu_custom_call.1} parent=1 // pred_check_branch
      %58 = sbr.rel (0) target = $region21
    $region20: #{tpu_custom_call.1} parent=1 // pred_region
      _
    $region21: #{tpu_custom_call.1} parent=1 // pred_fallthru
      _
    // Predicated region
    $region22: #{tpu_custom_call.1} parent=1 // pred_check
      _
    $region23: #{tpu_custom_call.1} parent=1 // pred_check_branch
      %60 = sbr.rel (0) target = $region25
    $region24: #{tpu_custom_call.1} parent=1 // pred_region
      %62 = vsyncadd [#allocation9], 0
      %s63 = sshll.u32 %s5, 4
      %s64 = int_to_ptr.hbm [resolvable:$true] %s63
      %s65 = sshll.u32 [#allocation8], 4
      %s66 = int_to_ptr.vmem [resolvable:$true] %s65
      %71 = dma.hbm_to_vmem [thread:$0]  %s64, 1024, %s66, [#allocation9], 64, 64, 4
    $region25: #{tpu_custom_call.1} parent=1 // pred_fallthru
      _
    // Predicated region
    $region26: #{tpu_custom_call.1} parent=1 // pred_check
      _
    $region27: #{tpu_custom_call.1} parent=1 // pred_check_branch
      %73 = sbr.rel (0) target = $region29
    $region28: #{tpu_custom_call.1} parent=1 // pred_region
      _
    $region29: #{tpu_custom_call.1} parent=1 // pred_fallthru
      _
    // Predicated region
    $region30: #{tpu_custom_call.1} parent=1 // pred_check
      _
    $region31: #{tpu_custom_call.1} parent=1 // pred_check_branch
      %75 = sbr.rel (0) target = $region33
    $region32: #{tpu_custom_call.1} parent=1 // pred_region
      %77 = dma.done [#allocation3], 128
    $region33: #{tpu_custom_call.1} parent=1 // pred_fallthru
      _
    // Predicated region
    $region34: #{tpu_custom_call.1} parent=1 // pred_check
      _
    $region35: #{tpu_custom_call.1} parent=1 // pred_check_branch
      %79 = sbr.rel (0) target = $region37
    $region36: #{tpu_custom_call.1} parent=1 // pred_region
      %81 = dma.done [#allocation6], 128
    $region37: #{tpu_custom_call.1} parent=1 // pred_fallthru
      _
    // Predicated region
    $region38: #{tpu_custom_call.1} parent=1 // pred_check
      _
    $region39: #{tpu_custom_call.1} parent=1 // pred_check_branch
      %83 = sbr.rel (0) target = $region41
    $region40: #{tpu_custom_call.1} parent=1 // pred_region
      %85 = dma.done [#allocation6], 1024
    $region41: #{tpu_custom_call.1} parent=1 // pred_fallthru
      _
    // Predicated region
    $region42: #{tpu_custom_call.1} parent=1 // pred_check
      _
    $region43: #{tpu_custom_call.1} parent=1 // pred_check_branch
      %87 = sbr.rel (0) target = $region45
    $region44: #{tpu_custom_call.1} parent=1 // pred_region
      %89 = dma.done [#allocation9], 1024
    $region45: #{tpu_custom_call.1} parent=1 // pred_fallthru
      _
    %v91 = vld [vmem:[#allocation2] sm:$0xf]
    %v92 = vld [vmem:[#allocation2 + $0x4] sm:$0xf]
    %v93 = vld [vmem:[#allocation5] sm:$0xf]
    %v94 = vld [vmem:[#allocation5 + $0x4] sm:$0xf]
    %v95 = vld [vmem:[%s2] sm:$0x1]
    %v97 = vperm.slane %v95, 0
    %v101 = vunpack.c.l.b16 %v91
    %v102 = vunpack.c.l.b16 %v92
    %v103 = vpack.c.b16 %v102, %v101
    %v106 = vunpack.c.l.b16 %v93
    %v107 = vunpack.c.l.b16 %v94
    %v108 = vpack.c.b16 %v107, %v106
    %vm110 = vcmask 130048
    %v112 = vsel %vm110, %v103, 0
    %114 = vmatpush.bf16.msra.mxu0 0
    %115 = vmatpush.bf16.msra.mxu0 0
    %116 = vmatpush.bf16.msra.mxu0 0
    %117 = vmatpush.bf16.msra.mxu0 0
    %118 = vmatpush.bf16.msra.mxu0 0
    %119 = vmatpush.bf16.msra.mxu0 0
    %120 = vmatpush.bf16.msra.mxu0 0
    %121 = vmatpush.bf16.msra.mxu0 %v108
    %122 = vmatmul.bf16.gmra.mxu0 %v112
    %v123 = vpop.f32.mrf.mxu0
    %v124 = vadd.f32 %v97, %v123
    %v125 = vpop.f32.mrf.mxu0
    %v126 = vadd.f32 %v97, %v125
    %127 = vdwg.mxu0
    %v128 = vmax.f32 %v124, 0.0
    %v129 = vmax.f32 %v126, 0.0
    %v130 = vpack.c.bf16 %v129, %v128
    %v131 = vld [vmem:[#allocation7] sm:$0xf]
    %v132 = vld [vmem:[#allocation7 + $0x4] sm:$0xf]
    %v133 = vld [vmem:[#allocation7 + $0x8] sm:$0xf]
    %v134 = vld [vmem:[#allocation7 + $0xc] sm:$0xf]
    %v135 = vld [vmem:[#allocation7 + $0x10] sm:$0xf]
    %v136 = vld [vmem:[#allocation7 + $0x14] sm:$0xf]
    %v137 = vld [vmem:[#allocation7 + $0x18] sm:$0xf]
    %v138 = vld [vmem:[#allocation7 + $0x1c] sm:$0xf]
    %v139 = vld [vmem:[#allocation7 + $0x20] sm:$0xf]
    %v140 = vld [vmem:[#allocation7 + $0x24] sm:$0xf]
    %v141 = vld [vmem:[#allocation7 + $0x28] sm:$0xf]
    %v142 = vld [vmem:[#allocation7 + $0x2c] sm:$0xf]
    %v143 = vld [vmem:[#allocation7 + $0x30] sm:$0xf]
    %v144 = vld [vmem:[#allocation7 + $0x34] sm:$0xf]
    %v145 = vld [vmem:[#allocation7 + $0x38] sm:$0xf]
    %v146 = vld [vmem:[#allocation7 + $0x3c] sm:$0xf]
    %v147 = vld [vmem:[%s4] sm:$0x1]
    %v149 = vperm.slane %v147, 0
    %v167 = vunpack.c.l.b16 %v131
    %v168 = vunpack.c.l.b16 %v132
    %v169 = vunpack.c.l.b16 %v133
    %v170 = vunpack.c.l.b16 %v134
    %v171 = vunpack.c.l.b16 %v135
    %v172 = vunpack.c.l.b16 %v136
    %v173 = vunpack.c.l.b16 %v137
    %v174 = vunpack.c.l.b16 %v138
    %v175 = vunpack.c.l.b16 %v139
    %v176 = vunpack.c.l.b16 %v140
    %v177 = vunpack.c.l.b16 %v141
    %v178 = vunpack.c.l.b16 %v142
    %v179 = vunpack.c.l.b16 %v143
    %v180 = vunpack.c.l.b16 %v144
    %v181 = vunpack.c.l.b16 %v145
    %v182 = vunpack.c.l.b16 %v146
    %v183 = vpack.c.b16 %v168, %v167
    %v184 = vpack.c.b16 %v170, %v169
    %v185 = vpack.c.b16 %v172, %v171
    %v186 = vpack.c.b16 %v174, %v173
    %v187 = vpack.c.b16 %v176, %v175
    %v188 = vpack.c.b16 %v178, %v177
    %v189 = vpack.c.b16 %v180, %v179
    %v190 = vpack.c.b16 %v182, %v181
    %199 = vmatpush.bf16.msra.mxu0 %v190
    %200 = vmatpush.bf16.msra.mxu0 %v189
    %201 = vmatpush.bf16.msra.mxu0 %v188
    %202 = vmatpush.bf16.msra.mxu0 %v187
    %203 = vmatpush.bf16.msra.mxu0 %v186
    %204 = vmatpush.bf16.msra.mxu0 %v185
    %205 = vmatpush.bf16.msra.mxu0 %v184
    %206 = vmatpush.bf16.msra.mxu0 %v183
    %207 = vmatmul.bf16.gmra.mxu0 %v130
    %v208 = vpop.f32.mrf.mxu0
    %v209 = vadd.f32 %v149, %v208
    %v210 = vpop.f32.mrf.mxu0
    %v211 = vadd.f32 %v149, %v210
    %212 = vdwg.mxu0
    %v213 = vmax.f32 %v209, 0.0
    %v214 = vmax.f32 %v211, 0.0
    %v215 = vpack.c.bf16 %v214, %v213
    %v216 = vld [vmem:[#allocation8] sm:$0xf]
    %v217 = vld [vmem:[#allocation8 + $0x4] sm:$0xf]
    %v218 = vld [vmem:[#allocation8 + $0x8] sm:$0xf]
    %v219 = vld [vmem:[#allocation8 + $0xc] sm:$0xf]
    %v220 = vld [vmem:[#allocation8 + $0x10] sm:$0xf]
    %v221 = vld [vmem:[#allocation8 + $0x14] sm:$0xf]
    %v222 = vld [vmem:[#allocation8 + $0x18] sm:$0xf]
    %v223 = vld [vmem:[#allocation8 + $0x1c] sm:$0xf]
    %v224 = vld [vmem:[#allocation8 + $0x20] sm:$0xf]
    %v225 = vld [vmem:[#allocation8 + $0x24] sm:$0xf]
    %v226 = vld [vmem:[#allocation8 + $0x28] sm:$0xf]
    %v227 = vld [vmem:[#allocation8 + $0x2c] sm:$0xf]
    %v228 = vld [vmem:[#allocation8 + $0x30] sm:$0xf]
    %v229 = vld [vmem:[#allocation8 + $0x34] sm:$0xf]
    %v230 = vld [vmem:[#allocation8 + $0x38] sm:$0xf]
    %v231 = vld [vmem:[#allocation8 + $0x3c] sm:$0xf]
    %v232 = vld [vmem:[%s6] sm:$0x1]
    %v234 = vperm.slane %v232, 0
    %v252 = vunpack.c.l.b16 %v216
    %v253 = vunpack.c.l.b16 %v217
    %v254 = vunpack.c.l.b16 %v218
    %v255 = vunpack.c.l.b16 %v219
    %v256 = vunpack.c.l.b16 %v220
    %v257 = vunpack.c.l.b16 %v221
    %v258 = vunpack.c.l.b16 %v222
    %v259 = vunpack.c.l.b16 %v223
    %v260 = vunpack.c.l.b16 %v224
    %v261 = vunpack.c.l.b16 %v225
    %v262 = vunpack.c.l.b16 %v226
    %v263 = vunpack.c.l.b16 %v227
    %v264 = vunpack.c.l.b16 %v228
    %v265 = vunpack.c.l.b16 %v229
    %v266 = vunpack.c.l.b16 %v230
    %v267 = vunpack.c.l.b16 %v231
    %v268 = vpack.c.b16 %v253, %v252
    %v269 = vpack.c.b16 %v255, %v254
    %v270 = vpack.c.b16 %v257, %v256
    %v271 = vpack.c.b16 %v259, %v258
    %v272 = vpack.c.b16 %v261, %v260
    %v273 = vpack.c.b16 %v263, %v262
    %v274 = vpack.c.b16 %v265, %v264
    %v275 = vpack.c.b16 %v267, %v266
    %284 = vmatpush.bf16.msra.mxu0 %v275
    %285 = vmatpush.bf16.msra.mxu0 %v274
    %286 = vmatpush.bf16.msra.mxu0 %v273
    %287 = vmatpush.bf16.msra.mxu0 %v272
    %288 = vmatpush.bf16.msra.mxu0 %v271
    %289 = vmatpush.bf16.msra.mxu0 %v270
    %290 = vmatpush.bf16.msra.mxu0 %v269
    %291 = vmatpush.bf16.msra.mxu0 %v268
    %292 = vmatmul.bf16.gmra.mxu0 %v215
    %v293 = vpop.f32.mrf.mxu0
    %v294 = vadd.f32 %v234, %v293
    %v295 = vpop.f32.mrf.mxu0
    %v296 = vadd.f32 %v234, %v295
    %297 = vdwg.mxu0
    %v298 = vlaneseq
    %v299 = vand.u32 %v298, 127
    %vm300 = vcmp.lt.s32.totalorder %v299, 8
    %v301 = vsel %vm300, 1, 0
    %vm302 = vcmp.eq.s32.totalorder %v301, 1
    %v303 = vsel %vm302, %v294, -1e+30
    %v304 = vsel %vm302, %v296, -1e+30
    %305 = vmax.xlane.f32.xlu0 %v303
    %v306 = vpop.xlane.xlu0 %305
    %307 = vmax.xlane.f32.xlu0 %v304
    %v308 = vpop.xlane.xlu0 %307
    %v309 = vsub.f32 %v303, %v306
    %v310 = vsub.f32 %v304, %v308
    %v311 = vmul.f32 %v309, 1.442695
    %v312 = vpow.pop %v311
    %v313 = vmul.f32 %v310, 1.442695
    %v314 = vpow.pop %v313
    %315 = vadd.xlane.f32.xlu0 %v312
    %v316 = vpop.xlane.xlu0 %315
    %317 = vadd.xlane.f32.xlu0 %v314
    %v318 = vpop.xlane.xlu0 %317
    %v319 = vrcp.pop %v316
    %v320 = vmul.f32 %v316, %v319
    %v321 = vsub.f32 1.0, %v320
    %v322 = vmul.f32 %v319, %v321
    %v323 = vadd.f32 %v319, %v322
    %vm324 = vweird.f32 %v316
    %vm325 = vweird.f32 %v319
    %vm326 = vmor %vm324, %vm325
    %v327 = vsel %vm326, %v319, %v323
    %v328 = vand.u32 2147483647, %v316
    %vm329 = vcmp.eq.f32.partialorder %v328, 8.507059e+37
    %v330 = vand.u32 %v316, 2147483648
    %v331 = vor.u32 1.1754944e-38, %v330
    %v332 = vsel %vm329, %v331, %v327
    %v333 = vmul.f32 %v312, %v332
    %v334 = vrcp.pop %v318
    %v335 = vmul.f32 %v318, %v334
    %v336 = vsub.f32 1.0, %v335
    %v337 = vmul.f32 %v334, %v336
    %v338 = vadd.f32 %v334, %v337
    %vm339 = vweird.f32 %v318
    %vm340 = vweird.f32 %v334
    %vm341 = vmor %vm339, %vm340
    %v342 = vsel %vm341, %v334, %v338
    %v343 = vand.u32 2147483647, %v318
    %vm344 = vcmp.eq.f32.partialorder %v343, 8.507059e+37
    %v345 = vand.u32 %v318, 2147483648
    %v346 = vor.u32 1.1754944e-38, %v345
    %v347 = vsel %vm344, %v346, %v342
    %v348 = vmul.f32 %v314, %v347
    %v349 = vsel %vm302, %v333, %v294
    %v350 = vsel %vm302, %v348, %v296
    %351 = vst [vmem:[#allocation10] sm:$0xff] %v349
    %352 = vst [vmem:[#allocation10 + $0x8] sm:$0xff] %v350
    // Predicated region
    $region46: #{tpu_custom_call.1} parent=1 // pred_check
      _
    $region47: #{tpu_custom_call.1} parent=1 // pred_check_branch
      %354 = sbr.rel (0) target = $region49
    $region48: #{tpu_custom_call.1} parent=1 // pred_region
      %356 = vsyncadd [#allocation4], 0
      %s357 = sshll.u32 [#allocation10], 4
      %s358 = int_to_ptr.vmem [resolvable:$true] %s357
      %s359 = sshll.u32 %s7, 4
      %s360 = int_to_ptr.hbm [resolvable:$true] %s359
      %365 = dma.vmem_to_hbm [thread:$0]  %s358, 256, %s360, [#allocation4], 128, 128, 8
    $region49: #{tpu_custom_call.1} parent=1 // pred_fallthru
      _
    // Predicated region
    $region50: #{tpu_custom_call.1} parent=1 // pred_check
      _
    $region51: #{tpu_custom_call.1} parent=1 // pred_check_branch
      %367 = sbr.rel (0) target = $region53
    $region52: #{tpu_custom_call.1} parent=1 // pred_region
      %369 = dma.done [#allocation4], 256
    $region53: #{tpu_custom_call.1} parent=1 // pred_fallthru
      _
    %370 = vsyncpa [#allocation3], 1
    %371 = vsyncpa [#allocation6], 1
    %372 = vsyncpa [#allocation9], 1
    %373 = vsyncpa [#allocation4], 1

</llo_original>
